<compile_context>
chip_gen: v6e
topology: v6e:2x2x1
jax: 0.10.0
libtpu: 0.0.40
codegen_flags: <defaults>
</compile_context>

<pallas_src>
import numpy as np
import jax
import jax.numpy as jnp
from jax.experimental import pallas as pl
from jax.experimental.pallas import tpu as pltpu


def _pick_tile_h(h, w, budget_bytes=2 << 20):
    """Largest tile_h that divides h, keeps (8,128) block legality, and whose
    (3, tile_h, w) f32 input block stays within budget_bytes."""
    candidates = [th for th in range(2, h + 1, 2)
                  if h % th == 0 and (th == h or th % 16 == 0)]
    fitting = [th for th in candidates if 3 * th * w * 4 <= budget_bytes]
    if fitting:
        return max(fitting)
    return min(candidates)


def _pool_matrices(tile_h, w):
    """Row/column pooling matrices with the 0.25 averaging factor folded in."""
    ph = np.zeros((tile_h // 2, tile_h), dtype=np.float32)
    idx = np.arange(tile_h // 2)
    ph[idx, 2 * idx] = 0.5
    ph[idx, 2 * idx + 1] = 0.5
    pw = np.zeros((w, w // 2), dtype=np.float32)
    jdx = np.arange(w // 2)
    pw[2 * jdx, jdx] = 0.5
    pw[2 * jdx + 1, jdx] = 0.5
    return jnp.asarray(ph), jnp.asarray(pw)


def _chroma_kernel(img_ref, ph_ref, pw_ref, y_ref, cb_ref, cr_ref):
    # img_ref: (1, 3, tile_h, W)   NCHW tile (all three channels)
    # ph_ref:  (tile_h//2, tile_h) row-pooling matrix (entries 0.5)
    # pw_ref:  (W, W//2)           col-pooling matrix (entries 0.5)
    # y_ref:   (1, tile_h, W)
    # cb_ref:  (1, tile_h//2, W//2)
    # cr_ref:  (1, tile_h//2, W//2)
    y_ref[0] = img_ref[0, 0]

    ph = ph_ref[...]
    pw = pw_ref[...]

    cb_rows = jnp.dot(ph, img_ref[0, 1], preferred_element_type=jnp.float32)
    cr_rows = jnp.dot(ph, img_ref[0, 2], preferred_element_type=jnp.float32)
    cb_ref[0] = jnp.dot(cb_rows, pw, preferred_element_type=jnp.float32)
    cr_ref[0] = jnp.dot(cr_rows, pw, preferred_element_type=jnp.float32)


def chroma_subsampling(image, *, tile_h=None):
    """image: (B, H, W, 3) float32 -> (y:(B,H,W), cb:(B,H/2,W/2), cr:(B,H/2,W/2))."""
    b, h, w, c = image.shape
    assert c == 3
    # TODO(synk): odd H/W (PyTorch floor-crops the trailing row/col) not handled.
    assert h % 2 == 0 and w % 2 == 0, "H and W must be even"

    image = image.astype(jnp.float32)
    if tile_h is None:
        tile_h = _pick_tile_h(h, w)
    assert h % tile_h == 0

    # Same permute(0, 3, 1, 2) the PyTorch module performs: channel-planar,
    # so W is the lane dimension inside the kernel.
    img_chw = jnp.transpose(image, (0, 3, 1, 2))
    ph, pw = _pool_matrices(tile_h, w)

    grid = (b, h // tile_h)

    y, cb, cr = pl.pallas_call(
        _chroma_kernel,
        out_shape=(
            jax.ShapeDtypeStruct((b, h, w), jnp.float32),
            jax.ShapeDtypeStruct((b, h // 2, w // 2), jnp.float32),
            jax.ShapeDtypeStruct((b, h // 2, w // 2), jnp.float32),
        ),
        grid_spec=pltpu.PrefetchScalarGridSpec(
            num_scalar_prefetch=0,
            grid=grid,
            in_specs=[
                pl.BlockSpec((1, 3, tile_h, w), lambda bi, hi: (bi, 0, hi, 0)),
                pl.BlockSpec((tile_h // 2, tile_h), lambda bi, hi: (0, 0)),
                pl.BlockSpec((w, w // 2), lambda bi, hi: (0, 0)),
            ],
            out_specs=(
                pl.BlockSpec((1, tile_h, w), lambda bi, hi: (bi, hi, 0)),
                pl.BlockSpec((1, tile_h // 2, w // 2), lambda bi, hi: (bi, hi, 0)),
                pl.BlockSpec((1, tile_h // 2, w // 2), lambda bi, hi: (bi, hi, 0)),
            ),
        ),
        compiler_params=pltpu.CompilerParams(
            dimension_semantics=("parallel", "parallel"),
            vmem_limit_bytes=32 * 1024 * 1024,
        ),
    )(img_chw, ph, pw)

    return y, cb, cr


if __name__ == "__main__":
    key = jax.random.PRNGKey(0)
    batch, height, width = 2, 16, 16
    image = jax.random.uniform(
        key, (batch, height, width, 3), dtype=jnp.float32) * 255.0

    y, cb, cr = chroma_subsampling(image)
    y, cb, cr = jax.block_until_ready((y, cb, cr))

    # Pure-JAX reference (same math as the PyTorch module).
    y_ref = image[:, :, :, 0]
    cb_ref = image[:, :, :, 1].reshape(
        batch, height // 2, 2, width // 2, 2).mean(axis=(2, 4))
    cr_ref = image[:, :, :, 2].reshape(
        batch, height // 2, 2, width // 2, 2).mean(axis=(2, 4))

    np.testing.assert_allclose(np.asarray(y), np.asarray(y_ref),
                               rtol=1e-6, atol=1e-5)
    np.testing.assert_allclose(np.asarray(cb), np.asarray(cb_ref),
                               rtol=1e-6, atol=1e-4)
    np.testing.assert_allclose(np.asarray(cr), np.asarray(cr_ref),
                               rtol=1e-6, atol=1e-4)

    print("KERNEL_OK")
</pallas_src>

<mosaic_0001>
module attributes {stable_mosaic.version = 11 : i64} {
  func.func @_chroma_kernel(%arg0: i32, %arg1: i32, %arg2: memref<1x3x16x16xf32, #tpu.memory_space<vmem>>, %arg3: memref<8x16xf32, #tpu.memory_space<vmem>>, %arg4: memref<16x8xf32, #tpu.memory_space<vmem>>, %arg5: memref<1x16x16xf32, #tpu.memory_space<vmem>>, %arg6: memref<1x8x8xf32, #tpu.memory_space<vmem>>, %arg7: memref<1x8x8xf32, #tpu.memory_space<vmem>>) attributes {dimension_semantics = [#tpu.dimension_semantics<parallel>, #tpu.dimension_semantics<parallel>], iteration_bounds = array<i64: 2, 1>, scalar_prefetch = 0 : i64, scratch_operands = 0 : i64, tpu.core_type = #tpu.core_type<tc>, window_params = [{transform_indices = @transform_0, window_bounds = array<i64: 1, 3, 16, 16>}, {pipeline_mode = #tpu.pipeline_mode<synchronous>, transform_indices = @transform_1, window_bounds = array<i64: 8, 16>}, {pipeline_mode = #tpu.pipeline_mode<synchronous>, transform_indices = @transform_2, window_bounds = array<i64: 16, 8>}, {transform_indices = @transform_3, window_bounds = array<i64: 1, 16, 16>}, {transform_indices = @transform_4, window_bounds = array<i64: 1, 8, 8>}, {transform_indices = @transform_5, window_bounds = array<i64: 1, 8, 8>}]} {
    %c0 = arith.constant 0 : index
    %c0_0 = arith.constant 0 : index
    %c0_1 = arith.constant 0 : index
    %c0_2 = arith.constant 0 : index
    %0 = vector.load %arg2[%c0, %c0_0, %c0_1, %c0_2] : memref<1x3x16x16xf32, #tpu.memory_space<vmem>>, vector<1x1x16x16xf32>
    %1 = vector.shape_cast %0 : vector<1x1x16x16xf32> to vector<16x16xf32>
    %c0_3 = arith.constant 0 : index
    %c0_4 = arith.constant 0 : index
    %c0_5 = arith.constant 0 : index
    %2 = vector.load %arg5[%c0_3, %c0_4, %c0_5] : memref<1x16x16xf32, #tpu.memory_space<vmem>>, vector<1x16x16xf32>
    %3 = vector.shape_cast %2 : vector<1x16x16xf32> to vector<16x16xf32>
    %4 = vector.shape_cast %1 : vector<16x16xf32> to vector<1x16x16xf32>
    tpu.vector_store %arg5[%c0_3, %c0_4, %c0_5], %4 {strides = array<i32>} : memref<1x16x16xf32, #tpu.memory_space<vmem>>, vector<1x16x16xf32>,
    %c0_6 = arith.constant 0 : index
    %c0_7 = arith.constant 0 : index
    %5 = vector.load %arg3[%c0_6, %c0_7] : memref<8x16xf32, #tpu.memory_space<vmem>>, vector<8x16xf32>
    %c0_8 = arith.constant 0 : index
    %c0_9 = arith.constant 0 : index
    %6 = vector.load %arg4[%c0_8, %c0_9] : memref<16x8xf32, #tpu.memory_space<vmem>>, vector<16x8xf32>
    %c0_10 = arith.constant 0 : index
    %c1 = arith.constant 1 : index
    %c0_11 = arith.constant 0 : index
    %c0_12 = arith.constant 0 : index
    %7 = vector.load %arg2[%c0_10, %c1, %c0_11, %c0_12] : memref<1x3x16x16xf32, #tpu.memory_space<vmem>>, vector<1x1x16x16xf32>
    %8 = vector.shape_cast %7 : vector<1x1x16x16xf32> to vector<16x16xf32>
    %cst = arith.constant dense<0.000000e+00> : vector<8x16xf32>
    %9 = tpu.matmul %5, %8, %cst {dimension_numbers = #tpu.dot_dimension_numbers<[1], [0], [0], [1], [0, 0, 1, 1], [], []>} : vector<8x16xf32>, vector<16x16xf32>, vector<8x16xf32> -> vector<8x16xf32>
    %c0_13 = arith.constant 0 : index
    %c2 = arith.constant 2 : index
    %c0_14 = arith.constant 0 : index
    %c0_15 = arith.constant 0 : index
    %10 = vector.load %arg2[%c0_13, %c2, %c0_14, %c0_15] : memref<1x3x16x16xf32, #tpu.memory_space<vmem>>, vector<1x1x16x16xf32>
    %11 = vector.shape_cast %10 : vector<1x1x16x16xf32> to vector<16x16xf32>
    %cst_16 = arith.constant dense<0.000000e+00> : vector<8x16xf32>
    %12 = tpu.matmul %5, %11, %cst_16 {dimension_numbers = #tpu.dot_dimension_numbers<[1], [0], [0], [1], [0, 0, 1, 1], [], []>} : vector<8x16xf32>, vector<16x16xf32>, vector<8x16xf32> -> vector<8x16xf32>
    %cst_17 = arith.constant dense<0.000000e+00> : vector<8x8xf32>
    %13 = tpu.matmul %9, %6, %cst_17 {dimension_numbers = #tpu.dot_dimension_numbers<[1], [0], [0], [1], [0, 0, 1, 1], [], []>} : vector<8x16xf32>, vector<16x8xf32>, vector<8x8xf32> -> vector<8x8xf32>
    %c0_18 = arith.constant 0 : index
    %c0_19 = arith.constant 0 : index
    %c0_20 = arith.constant 0 : index
    %14 = vector.load %arg6[%c0_18, %c0_19, %c0_20] : memref<1x8x8xf32, #tpu.memory_space<vmem>>, vector<1x8x8xf32>
    %15 = vector.shape_cast %14 : vector<1x8x8xf32> to vector<8x8xf32>
    %16 = vector.shape_cast %13 : vector<8x8xf32> to vector<1x8x8xf32>
    tpu.vector_store %arg6[%c0_18, %c0_19, %c0_20], %16 {strides = array<i32>} : memref<1x8x8xf32, #tpu.memory_space<vmem>>, vector<1x8x8xf32>,
    %cst_21 = arith.constant dense<0.000000e+00> : vector<8x8xf32>
    %17 = tpu.matmul %12, %6, %cst_21 {dimension_numbers = #tpu.dot_dimension_numbers<[1], [0], [0], [1], [0, 0, 1, 1], [], []>} : vector<8x16xf32>, vector<16x8xf32>, vector<8x8xf32> -> vector<8x8xf32>
    %c0_22 = arith.constant 0 : index
    %c0_23 = arith.constant 0 : index
    %c0_24 = arith.constant 0 : index
    %18 = vector.load %arg7[%c0_22, %c0_23, %c0_24] : memref<1x8x8xf32, #tpu.memory_space<vmem>>, vector<1x8x8xf32>
    %19 = vector.shape_cast %18 : vector<1x8x8xf32> to vector<8x8xf32>
    %20 = vector.shape_cast %17 : vector<8x8xf32> to vector<1x8x8xf32>
    tpu.vector_store %arg7[%c0_22, %c0_23, %c0_24], %20 {strides = array<i32>} : memref<1x8x8xf32, #tpu.memory_space<vmem>>, vector<1x8x8xf32>,
    return
  }
  func.func @transform_0(%arg0: i32, %arg1: i32) -> (i32, i32, i32, i32) {
    %c0_i32 = arith.constant 0 : i32
    %c0_i32_0 = arith.constant 0 : i32
    %c0_i32_1 = arith.constant 0 : i32
    return %arg0, %c0_i32, %arg1, %c0_i32_0 : i32, i32, i32, i32
  }
  func.func @transform_1(%arg0: i32, %arg1: i32) -> (i32, i32) {
    %c0_i32 = arith.constant 0 : i32
    %c0_i32_0 = arith.constant 0 : i32
    %c0_i32_1 = arith.constant 0 : i32
    return %c0_i32, %c0_i32_0 : i32, i32
  }
  func.func @transform_2(%arg0: i32, %arg1: i32) -> (i32, i32) {
    %c0_i32 = arith.constant 0 : i32
    %c0_i32_0 = arith.constant 0 : i32
    %c0_i32_1 = arith.constant 0 : i32
    return %c0_i32, %c0_i32_0 : i32, i32
  }
  func.func @transform_3(%arg0: i32, %arg1: i32) -> (i32, i32, i32) {
    %c0_i32 = arith.constant 0 : i32
    %c0_i32_0 = arith.constant 0 : i32
    return %arg0, %arg1, %c0_i32 : i32, i32, i32
  }
  func.func @transform_4(%arg0: i32, %arg1: i32) -> (i32, i32, i32) {
    %c0_i32 = arith.constant 0 : i32
    %c0_i32_0 = arith.constant 0 : i32
    return %arg0, %arg1, %c0_i32 : i32, i32, i32
  }
  func.func @transform_5(%arg0: i32, %arg1: i32) -> (i32, i32, i32) {
    %c0_i32 = arith.constant 0 : i32
    %c0_i32_0 = arith.constant 0 : i32
    return %arg0, %arg1, %c0_i32 : i32, i32, i32
  }
}

</mosaic_0001>

<llo_original>
// kernel: tpu_custom_call.1
$region0: #{tpu_custom_call.1}
  #allocation0 [shape = 'u32[]', space=smem, size = 0x4, offset = 0x4, fixed_abs, tag = 'smem constant byte address 0x4 - core index']
  #allocation1 [shape = 'u32[144,128]{1,0:T(1,128)}', space=vmem, size = 0x12000, scoped, tag = 'internal scratch']
  %s0 = inlined_call_operand.hbm [shape: f32[2,3,16,16], index: 0, kind: input, shape index: {}]
  %s1 = inlined_call_operand.vmem [shape: f32[8,16], index: 1, kind: input, shape index: {}]
  %s2 = inlined_call_operand.vmem [shape: f32[16,8], index: 2, kind: input, shape index: {}]
  %s3 = inlined_call_operand.hbm [shape: f32[2,16,16], index: 3, kind: output, shape index: {0}]
  %s4 = inlined_call_operand.hbm [shape: f32[2,8,8], index: 4, kind: output, shape index: {1}]
  %s5 = inlined_call_operand.hbm [shape: f32[2,8,8], index: 5, kind: output, shape index: {2}]
  %6 = xla_tuple %s3, %s4, %s5
  %s7 = sld [smem:[#allocation0]]
  $region65: #{tpu_custom_call.1} parent=0
    _
  %s9 = ssub.s32 1, %s7
  %s10 = scalar_select 0, %s9, %s7
  $region1: #{tpu_custom_call.1} parent=0
    #allocation2 [shape = 'u8[49152]{0}', space=vmem, size = 0xc000, scoped, tag = 'input window, operand 0']
    #allocation3 [shape = 's32[2]{0}', space=sflag, size = 0x8, scoped, tag = 'scoped memory for tpu_custom_call.1']
    #allocation4 [shape = 's32[2]{0}', space=sflag, size = 0x8, scoped, tag = 'scoped memory for tpu_custom_call.1']
    #allocation5 [shape = 'u8[16384]{0}', space=vmem, size = 0x4000, scoped, tag = 'output window, operand 0']
    #allocation6 [shape = 'u8[8192]{0}', space=vmem, size = 0x2000, scoped, tag = 'output window, operand 1']
    #allocation7 [shape = 's32[2]{0}', space=sflag, size = 0x8, scoped, tag = 'scoped memory for tpu_custom_call.1']
    #allocation8 [shape = 'u8[8192]{0}', space=vmem, size = 0x2000, scoped, tag = 'output window, operand 2']
    %11 = vsyncpa [#allocation3], 0
    %s12 = scalar_lea.sflag [#allocation3], 1
    %13 = vsyncpa %s12, 0
    %14 = vsyncpa [#allocation4], 0
    %s15 = scalar_lea.sflag [#allocation4], 1
    %16 = vsyncpa %s15, 0
    %17 = vsyncpa [#allocation7], 0
    %s18 = scalar_lea.sflag [#allocation7], 1
    %19 = vsyncpa %s18, 0
    loop: start=0, step=1, limit=4
    $region2: #{tpu_custom_call.1} parent=1 // loop_pre_header
      _
    $region3: #{tpu_custom_call.1} parent=1 // loop_header
      %s21 = sphi 0, %s25
      %p22 = scmp.ge.s32.totalorder %s21, 4
      %s28 = sphi 0, %s40
      %s29 = sphi 0, %s36
      %s30 = sphi 0, %s28
      %s31 = sphi 0, %s29
      %s32 = sphi 0, %s30
      %s33 = sphi 0, %s31
      %s45 = sphi 0, %s47
      %s48 = sphi 0, %s45
      %s49 = sphi 0, %s48
      %s65 = sphi 0, %s49
      %s69 = sphi 0, %s69
      %s71 = sphi 0, %s69
      %s72 = sphi 0, %s71
      %s86 = sphi 0, %s72
      %s90 = sphi 0, %s90
      %s92 = sphi 0, %s90
      %s93 = sphi 0, %s92
      %s107 = sphi 0, %s93
      %s115 = sphi 0, %s117
      %s118 = sphi 0, %s115
      %s119 = sphi 0, %s118
      %s135 = sphi 0, %s119
      %s143 = sphi 0, %s145
      %s146 = sphi 0, %s143
      %s147 = sphi 0, %s146
      %s163 = sphi 0, %s147
      %s171 = sphi 0, %s173
      %s174 = sphi 0, %s171
      %s175 = sphi 0, %s174
      %s191 = sphi 0, %s175
    $region4: #{tpu_custom_call.1} parent=1 // loop_header_branch
      %24 = sbr.rel (%p22) target = $region8
    $region5: #{tpu_custom_call.1} parent=1 // loop_body
      %s26 = ssub.s32 %s21, 1
      %s27 = ssub.s32 %s21, 2
      %s34 = sadd.s32 1, %s29
      %p35 = scmp.ge.s32.totalorder %s34, 1
      %s36 = scalar_select %p35, 0, %s34
      %s37 = sadd.s32 1, %s28
      %s38 = scalar_select %p35, %s37, %s28
      %p39 = scmp.ge.s32.totalorder %s38, 2
      %s40 = scalar_select %p39, 0, %s38
      %s41 = ssub.s32 %s28, %s40
      %s42 = ssub.s32 %s29, %s36
      %s43 = sor.u32 %s41, %s42
      %p44 = scmp.eq.s32.totalorder %s43, 0
      %s46 = sadd.s32 %s45, 1
      %s47 = scalar_select %p44, %s45, %s46
      %p50 = pneg %p44
      %p51 = scmp.eq.s32.totalorder %s21, 1
      %p52 = por %p50, %p51
      %p53 = scmp.ne.s32.totalorder %s45, %s48
      %p54 = scmp.eq.s32.totalorder %s21, 0
      %p55 = por %p53, %p54
      %p56 = scmp.ne.s32.totalorder %s45, %s48
      %p57 = scmp.eq.s32.totalorder %s26, 1
      %p58 = por %p56, %p57
      %p59 = scmp.ne.s32.totalorder %s48, %s49
      %p60 = scmp.eq.s32.totalorder %s26, 0
      %p61 = por %p59, %p60
      %p62 = scmp.ne.s32.totalorder %s48, %s49
      %p63 = scmp.eq.s32.totalorder %s27, 1
      %p64 = por %p62, %p63
      %p66 = scmp.ne.s32.totalorder %s49, %s65
      %p67 = scmp.eq.s32.totalorder %s27, 0
      %p68 = por %p66, %p67
      %s70 = sadd.s32 %s69, 1
      %p73 = scmp.eq.s32.totalorder %s21, 1
      %p74 = scmp.ne.s32.totalorder %s69, %s71
      %p75 = scmp.eq.s32.totalorder %s21, 0
      %p76 = por %p74, %p75
      %p77 = scmp.ne.s32.totalorder %s69, %s71
      %p78 = scmp.eq.s32.totalorder %s26, 1
      %p79 = por %p77, %p78
      %p80 = scmp.ne.s32.totalorder %s71, %s72
      %p81 = scmp.eq.s32.totalorder %s26, 0
      %p82 = por %p80, %p81
      %p83 = scmp.ne.s32.totalorder %s71, %s72
      %p84 = scmp.eq.s32.totalorder %s27, 1
      %p85 = por %p83, %p84
      %p87 = scmp.ne.s32.totalorder %s72, %s86
      %p88 = scmp.eq.s32.totalorder %s27, 0
      %p89 = por %p87, %p88
      %s91 = sadd.s32 %s90, 1
      %p94 = scmp.eq.s32.totalorder %s21, 1
      %p95 = scmp.ne.s32.totalorder %s90, %s92
      %p96 = scmp.eq.s32.totalorder %s21, 0
      %p97 = por %p95, %p96
      %p98 = scmp.ne.s32.totalorder %s90, %s92
      %p99 = scmp.eq.s32.totalorder %s26, 1
      %p100 = por %p98, %p99
      %p101 = scmp.ne.s32.totalorder %s92, %s93
      %p102 = scmp.eq.s32.totalorder %s26, 0
      %p103 = por %p101, %p102
      %p104 = scmp.ne.s32.totalorder %s92, %s93
      %p105 = scmp.eq.s32.totalorder %s27, 1
      %p106 = por %p104, %p105
      %p108 = scmp.ne.s32.totalorder %s93, %s107
      %p109 = scmp.eq.s32.totalorder %s27, 0
      %p110 = por %p108, %p109
      %s111 = ssub.s32 %s28, %s40
      %s112 = ssub.s32 %s29, %s36
      %s113 = sor.u32 %s111, %s112
      %p114 = scmp.eq.s32.totalorder %s113, 0
      %s116 = sadd.s32 %s115, 1
      %s117 = scalar_select %p114, %s115, %s116
      %p120 = pneg %p114
      %p121 = scmp.eq.s32.totalorder %s21, 1
      %p122 = por %p120, %p121
      %p123 = scmp.ne.s32.totalorder %s115, %s118
      %p124 = scmp.eq.s32.totalorder %s21, 0
      %p125 = por %p123, %p124
      %p126 = scmp.ne.s32.totalorder %s115, %s118
      %p127 = scmp.eq.s32.totalorder %s26, 1
      %p128 = por %p126, %p127
      %p129 = scmp.ne.s32.totalorder %s118, %s119
      %p130 = scmp.eq.s32.totalorder %s26, 0
      %p131 = por %p129, %p130
      %p132 = scmp.ne.s32.totalorder %s118, %s119
      %p133 = scmp.eq.s32.totalorder %s27, 1
      %p134 = por %p132, %p133
      %p136 = scmp.ne.s32.totalorder %s119, %s135
      %p137 = scmp.eq.s32.totalorder %s27, 0
      %p138 = por %p136, %p137
      %s139 = ssub.s32 %s28, %s40
      %s140 = ssub.s32 %s29, %s36
      %s141 = sor.u32 %s139, %s140
      %p142 = scmp.eq.s32.totalorder %s141, 0
      %s144 = sadd.s32 %s143, 1
      %s145 = scalar_select %p142, %s143, %s144
      %p148 = pneg %p142
      %p149 = scmp.eq.s32.totalorder %s21, 1
      %p150 = por %p148, %p149
      %p151 = scmp.ne.s32.totalorder %s143, %s146
      %p152 = scmp.eq.s32.totalorder %s21, 0
      %p153 = por %p151, %p152
      %p154 = scmp.ne.s32.totalorder %s143, %s146
      %p155 = scmp.eq.s32.totalorder %s26, 1
      %p156 = por %p154, %p155
      %p157 = scmp.ne.s32.totalorder %s146, %s147
      %p158 = scmp.eq.s32.totalorder %s26, 0
      %p159 = por %p157, %p158
      %p160 = scmp.ne.s32.totalorder %s146, %s147
      %p161 = scmp.eq.s32.totalorder %s27, 1
      %p162 = por %p160, %p161
      %p164 = scmp.ne.s32.totalorder %s147, %s163
      %p165 = scmp.eq.s32.totalorder %s27, 0
      %p166 = por %p164, %p165
      %s167 = ssub.s32 %s28, %s40
      %s168 = ssub.s32 %s29, %s36
      %s169 = sor.u32 %s167, %s168
      %p170 = scmp.eq.s32.totalorder %s169, 0
      %s172 = sadd.s32 %s171, 1
      %s173 = scalar_select %p170, %s171, %s172
      %p176 = pneg %p170
      %p177 = scmp.eq.s32.totalorder %s21, 1
      %p178 = por %p176, %p177
      %p179 = scmp.ne.s32.totalorder %s171, %s174
      %p180 = scmp.eq.s32.totalorder %s21, 0
      %p181 = por %p179, %p180
      %p182 = scmp.ne.s32.totalorder %s171, %s174
      %p183 = scmp.eq.s32.totalorder %s26, 1
      %p184 = por %p182, %p183
      %p185 = scmp.ne.s32.totalorder %s174, %s175
      %p186 = scmp.eq.s32.totalorder %s26, 0
      %p187 = por %p185, %p186
      %p188 = scmp.ne.s32.totalorder %s174, %s175
      %p189 = scmp.eq.s32.totalorder %s27, 1
      %p190 = por %p188, %p189
      %p192 = scmp.ne.s32.totalorder %s175, %s191
      %p193 = scmp.eq.s32.totalorder %s27, 0
      %p194 = por %p192, %p193
      %p195 = scmp.le.s32.totalorder 1, %s21
      %p196 = scmp.lt.s32.totalorder %s21, 3
      %p197 = pnand %p195, %p196
      %p198 = pneg %p197
      // Predicated region
      $region9: #{tpu_custom_call.1} parent=5 // pred_check
        _
      $region10: #{tpu_custom_call.1} parent=5 // pred_check_branch
        %200 = sbr.rel (%p197) target = $region12
      $region11: #{tpu_custom_call.1} parent=5 // pred_region
        %s201 = ssub.s32 %s21, 1
        // Predicated region
        $region13: #{tpu_custom_call.1} parent=11 // pred_check
          %p202 = pneg %p82
        $region14: #{tpu_custom_call.1} parent=11 // pred_check_branch
          %204 = sbr.rel (%p202) target = $region16
        $region15: #{tpu_custom_call.1} parent=11 // pred_region
          _
        $region16: #{tpu_custom_call.1} parent=11 // pred_fallthru
          _
        // Predicated region
        $region17: #{tpu_custom_call.1} parent=11 // pred_check
          %p205 = pneg %p103
        $region18: #{tpu_custom_call.1} parent=11 // pred_check_branch
          %207 = sbr.rel (%p205) target = $region20
        $region19: #{tpu_custom_call.1} parent=11 // pred_region
          _
        $region20: #{tpu_custom_call.1} parent=11 // pred_fallthru
          _
      $region12: #{tpu_custom_call.1} parent=5 // pred_fallthru
        _
      %p208 = scmp.lt.s32.totalorder %s21, 2
      // Predicated region
      $region21: #{tpu_custom_call.1} parent=5 // pred_check
        %p209 = pneg %p208
      $region22: #{tpu_custom_call.1} parent=5 // pred_check_branch
        %211 = sbr.rel (%p209) target = $region24
      $region23: #{tpu_custom_call.1} parent=5 // pred_region
        // Predicated region
        $region25: #{tpu_custom_call.1} parent=23 // pred_check
          %p212 = pneg %p55
        $region26: #{tpu_custom_call.1} parent=23 // pred_check_branch
          %214 = sbr.rel (%p212) target = $region28
        $region27: #{tpu_custom_call.1} parent=23 // pred_region
          %s215 = sand.u32 %s45, 1
          %s216 = scalar_lea.sflag [#allocation3], %s215
          %s217 = sand.u32 %s45, 1
          %s218 = smul.addr %s217, 48
          %s219 = scalar_lea.vmem [#allocation2], %s218
          %s220 = smul.u32 2, %s29
          %s222 = ssub.s32 768, 768
          %223 = vsyncadd %s216, %s222
          %s224 = smul.addr %s28, 6
          %s225 = sadd.s32 %s220, %s224
          %s226 = smul.addr %s225, 128
          %s227 = scalar_lea.hbm %s0, %s226
          %s228 = sshll.u32 %s219, 4
          %s229 = int_to_ptr.vmem [resolvable:$true] %s228
          %234 = dma.hbm_to_vmem [thread:$0]  %s227, 768, %s229, %s216, 128, 128, 8
        $region28: #{tpu_custom_call.1} parent=23 // pred_fallthru
          _
      $region24: #{tpu_custom_call.1} parent=5 // pred_fallthru
        _
      %p235 = scmp.le.s32.totalorder 1, %s21
      %p236 = scmp.lt.s32.totalorder %s21, 3
      %p237 = pnand %p235, %p236
      %p238 = pneg %p237
      // Predicated region
      $region29: #{tpu_custom_call.1} parent=5 // pred_check
        _
      $region30: #{tpu_custom_call.1} parent=5 // pred_check_branch
        %240 = sbr.rel (%p237) target = $region32
      $region31: #{tpu_custom_call.1} parent=5 // pred_region
        %s241 = ssub.s32 %s21, 1
        %s242 = sand.u32 %s48, 1
        %s243 = scalar_lea.sflag [#allocation3], %s242
        %s244 = sand.u32 %s48, 1
        %s245 = smul.addr %s244, 48
        %s246 = scalar_lea.vmem [#allocation2], %s245
        // Predicated region
        $region33: #{tpu_custom_call.1} parent=31 // pred_check
          %p247 = pneg %p61
        $region34: #{tpu_custom_call.1} parent=31 // pred_check_branch
          %249 = sbr.rel (%p247) target = $region36
        $region35: #{tpu_custom_call.1} parent=31 // pred_region
          %250 = dma.done %s243, 768
        $region36: #{tpu_custom_call.1} parent=31 // pred_fallthru
          _
        %s251 = sand.u32 %s48, 1
        %s252 = scalar_lea.sflag [#allocation3], %s251
        %s253 = sand.u32 %s48, 1
        %s254 = smul.addr %s253, 48
        %s255 = scalar_lea.vmem [#allocation2], %s254
        %p256 = pneg %p61
        %p257 = pneg %p58
        %p258 = pneg %p82
        %p259 = pneg %p79
        %p260 = pneg %p103
        %p261 = pneg %p100
        %p262 = pneg %p131
        %p263 = pneg %p128
        %s264 = sand.u32 %s118, 1
        %s265 = scalar_lea.sflag [#allocation4], %s264
        %s266 = sand.u32 %s118, 1
        %s267 = smul.addr %s266, 16
        %s268 = scalar_lea.vmem [#allocation5], %s267
        %p269 = pneg %p159
        %p270 = pneg %p156
        %s271 = sand.u32 %s26, 1
        %s272 = scalar_lea.sflag [#allocation7], %s271
        %s273 = sand.u32 %s146, 1
        %s274 = smul.addr %s273, 8
        %s275 = scalar_lea.vmem [#allocation6], %s274
        %p276 = pneg %p187
        %p277 = pneg %p184
        %s278 = sand.u32 %s26, 1
        %s279 = scalar_lea.sflag [#allocation7], %s278
        %s280 = sand.u32 %s174, 1
        %s281 = smul.addr %s280, 8
        %s282 = scalar_lea.vmem [#allocation8], %s281
        %s283 = smul.u32 2, %s31
        %s284 = smul.u32 2, %s31
        %v285 = vld [vmem:[%s246] sm:$0xff]
        %v286 = vld [vmem:[%s246 + $0x8] sm:$0xff]
        %vm287 = vcmask 130048
        %288 = vst.msk [vmem:[%s268] sm:$0xff] %vm287, %v285
        %289 = vst.msk [vmem:[%s268 + $0x8] sm:$0xff] %vm287, %v286
        %v290 = vld [vmem:[%s1] sm:$0xff]
        %v291 = vld [vmem:[%s2] sm:$0xff]
        %v292 = vld [vmem:[%s2 + $0x8] sm:$0xff]
        %s293 = scalar_lea.vmem %s246, 16 [#allocation2]
        %v294 = vld [vmem:[%s293] sm:$0xff]
        %v295 = vld [vmem:[%s293 + $0x8] sm:$0xff]
        %v297 = vsel %vm287, %v290, 0
        %299 = vmatprep.subr.mxu0 0.0
        %300 = vmatpush1.msra.mxu0 0.0
        %301 = vmatprep.subr.mxu0 0.0
        %302 = vmatpush1.msra.mxu0 0.0
        %303 = vmatprep.subr.mxu0 0.0
        %304 = vmatpush1.msra.mxu0 0.0
        %305 = vmatprep.subr.mxu0 0.0
        %306 = vmatpush1.msra.mxu0 0.0
        %307 = vmatprep.subr.mxu0 0.0
        %308 = vmatpush1.msra.mxu0 0.0
        %309 = vmatprep.subr.mxu0 0.0
        %310 = vmatpush1.msra.mxu0 0.0
        %311 = vmatprep.subr.mxu0 0.0
        %312 = vmatpush1.msra.mxu0 0.0
        %313 = vmatprep.subr.mxu0 0.0
        %314 = vmatpush1.msra.mxu0 0.0
        %315 = vmatprep.subr.mxu0 0.0
        %316 = vmatpush1.msra.mxu0 0.0
        %317 = vmatprep.subr.mxu0 0.0
        %318 = vmatpush1.msra.mxu0 0.0
        %319 = vmatprep.subr.mxu0 0.0
        %320 = vmatpush1.msra.mxu0 0.0
        %321 = vmatprep.subr.mxu0 0.0
        %322 = vmatpush1.msra.mxu0 0.0
        %323 = vmatprep.subr.mxu0 0.0
        %324 = vmatpush1.msra.mxu0 0.0
        %325 = vmatprep.subr.mxu0 0.0
        %326 = vmatpush1.msra.mxu0 0.0
        %327 = vmatprep.subr.mxu0 0.0
        %328 = vmatpush1.msra.mxu0 %v295
        %329 = vmatprep.subr.mxu0 0.0
        %330 = vmatpush1.msra.mxu0 %v294
        %331 = vmatprep.subr.mxu0 0.0
        %332 = vmatpush2.msra.mxu0 0.0
        %333 = vmatprep.subr.mxu0 0.0
        %334 = vmatpush2.msra.mxu0 0.0
        %335 = vmatprep.subr.mxu0 0.0
        %336 = vmatpush2.msra.mxu0 0.0
        %337 = vmatprep.subr.mxu0 0.0
        %338 = vmatpush2.msra.mxu0 0.0
        %339 = vmatprep.subr.mxu0 0.0
        %340 = vmatpush2.msra.mxu0 0.0
        %341 = vmatprep.subr.mxu0 0.0
        %342 = vmatpush2.msra.mxu0 0.0
        %343 = vmatprep.subr.mxu0 0.0
        %344 = vmatpush2.msra.mxu0 0.0
        %345 = vmatprep.subr.mxu0 0.0
        %346 = vmatpush2.msra.mxu0 0.0
        %347 = vmatprep.subr.mxu0 0.0
        %348 = vmatpush2.msra.mxu0 0.0
        %349 = vmatprep.subr.mxu0 0.0
        %350 = vmatpush2.msra.mxu0 0.0
        %351 = vmatprep.subr.mxu0 0.0
        %352 = vmatpush2.msra.mxu0 0.0
        %353 = vmatprep.subr.mxu0 0.0
        %354 = vmatpush2.msra.mxu0 0.0
        %355 = vmatprep.subr.mxu0 0.0
        %356 = vmatpush2.msra.mxu0 0.0
        %357 = vmatprep.subr.mxu0 0.0
        %358 = vmatpush2.msra.mxu0 0.0
        %359 = vmatprep.subr.mxu0 0.0
        %360 = vmatpush2.msra.mxu0 0.0
        %361 = vmatprep.subr.mxu0 0.0
        %362 = vmatpush2.msra.mxu0 0.0
        %363 = vmatprep.mubr.f32.mxu0 0.0
        %364 = vmatmul.mubr.f32.gmra.mxu0 %v297
        %v365 = vpop.f32.mrf.mxu0
        %v366 = vadd.f32 0.0, %v365
        %v367 = vpop.f32.mrf.mxu0
        %368 = vdwg.mxu0
        %s369 = scalar_lea.vmem %s246, 32 [#allocation2]
        %v370 = vld [vmem:[%s369] sm:$0xff]
        %v371 = vld [vmem:[%s369 + $0x8] sm:$0xff]
        %372 = vmatprep.subr.mxu0 0.0
        %373 = vmatpush1.msra.mxu0 0.0
        %374 = vmatprep.subr.mxu0 0.0
        %375 = vmatpush1.msra.mxu0 0.0
        %376 = vmatprep.subr.mxu0 0.0
        %377 = vmatpush1.msra.mxu0 0.0
        %378 = vmatprep.subr.mxu0 0.0
        %379 = vmatpush1.msra.mxu0 0.0
        %380 = vmatprep.subr.mxu0 0.0
        %381 = vmatpush1.msra.mxu0 0.0
        %382 = vmatprep.subr.mxu0 0.0
        %383 = vmatpush1.msra.mxu0 0.0
        %384 = vmatprep.subr.mxu0 0.0
        %385 = vmatpush1.msra.mxu0 0.0
        %386 = vmatprep.subr.mxu0 0.0
        %387 = vmatpush1.msra.mxu0 0.0
        %388 = vmatprep.subr.mxu0 0.0
        %389 = vmatpush1.msra.mxu0 0.0
        %390 = vmatprep.subr.mxu0 0.0
        %391 = vmatpush1.msra.mxu0 0.0
        %392 = vmatprep.subr.mxu0 0.0
        %393 = vmatpush1.msra.mxu0 0.0
        %394 = vmatprep.subr.mxu0 0.0
        %395 = vmatpush1.msra.mxu0 0.0
        %396 = vmatprep.subr.mxu0 0.0
        %397 = vmatpush1.msra.mxu0 0.0
        %398 = vmatprep.subr.mxu0 0.0
        %399 = vmatpush1.msra.mxu0 0.0
        %400 = vmatprep.subr.mxu0 0.0
        %401 = vmatpush1.msra.mxu0 %v371
        %402 = vmatprep.subr.mxu0 0.0
        %403 = vmatpush1.msra.mxu0 %v370
        %404 = vmatprep.subr.mxu0 0.0
        %405 = vmatpush2.msra.mxu0 0.0
        %406 = vmatprep.subr.mxu0 0.0
        %407 = vmatpush2.msra.mxu0 0.0
        %408 = vmatprep.subr.mxu0 0.0
        %409 = vmatpush2.msra.mxu0 0.0
        %410 = vmatprep.subr.mxu0 0.0
        %411 = vmatpush2.msra.mxu0 0.0
        %412 = vmatprep.subr.mxu0 0.0
        %413 = vmatpush2.msra.mxu0 0.0
        %414 = vmatprep.subr.mxu0 0.0
        %415 = vmatpush2.msra.mxu0 0.0
        %416 = vmatprep.subr.mxu0 0.0
        %417 = vmatpush2.msra.mxu0 0.0
        %418 = vmatprep.subr.mxu0 0.0
        %419 = vmatpush2.msra.mxu0 0.0
        %420 = vmatprep.subr.mxu0 0.0
        %421 = vmatpush2.msra.mxu0 0.0
        %422 = vmatprep.subr.mxu0 0.0
        %423 = vmatpush2.msra.mxu0 0.0
        %424 = vmatprep.subr.mxu0 0.0
        %425 = vmatpush2.msra.mxu0 0.0
        %426 = vmatprep.subr.mxu0 0.0
        %427 = vmatpush2.msra.mxu0 0.0
        %428 = vmatprep.subr.mxu0 0.0
        %429 = vmatpush2.msra.mxu0 0.0
        %430 = vmatprep.subr.mxu0 0.0
        %431 = vmatpush2.msra.mxu0 0.0
        %432 = vmatprep.subr.mxu0 0.0
        %433 = vmatpush2.msra.mxu0 0.0
        %434 = vmatprep.subr.mxu0 0.0
        %435 = vmatpush2.msra.mxu0 0.0
        %436 = vmatprep.mubr.f32.mxu0 0.0
        %437 = vmatmul.mubr.f32.gmra.mxu0 %v297
        %v438 = vpop.f32.mrf.mxu0
        %v439 = vadd.f32 0.0, %v438
        %v440 = vpop.f32.mrf.mxu0
        %441 = vdwg.mxu0
        %v443 = vsel %vm287, %v366, 0
        %445 = vmatprep.subr.mxu0 0.0
        %446 = vmatpush1.msra.mxu0 0.0
        %447 = vmatprep.subr.mxu0 0.0
        %448 = vmatpush1.msra.mxu0 0.0
        %449 = vmatprep.subr.mxu0 0.0
        %450 = vmatpush1.msra.mxu0 0.0
        %451 = vmatprep.subr.mxu0 0.0
        %452 = vmatpush1.msra.mxu0 0.0
        %453 = vmatprep.subr.mxu0 0.0
        %454 = vmatpush1.msra.mxu0 0.0
        %455 = vmatprep.subr.mxu0 0.0
        %456 = vmatpush1.msra.mxu0 0.0
        %457 = vmatprep.subr.mxu0 0.0
        %458 = vmatpush1.msra.mxu0 0.0
        %459 = vmatprep.subr.mxu0 0.0
        %460 = vmatpush1.msra.mxu0 0.0
        %461 = vmatprep.subr.mxu0 0.0
        %462 = vmatpush1.msra.mxu0 0.0
        %463 = vmatprep.subr.mxu0 0.0
        %464 = vmatpush1.msra.mxu0 0.0
        %465 = vmatprep.subr.mxu0 0.0
        %466 = vmatpush1.msra.mxu0 0.0
        %467 = vmatprep.subr.mxu0 0.0
        %468 = vmatpush1.msra.mxu0 0.0
        %469 = vmatprep.subr.mxu0 0.0
        %470 = vmatpush1.msra.mxu0 0.0
        %471 = vmatprep.subr.mxu0 0.0
        %472 = vmatpush1.msra.mxu0 0.0
        %473 = vmatprep.subr.mxu0 0.0
        %474 = vmatpush1.msra.mxu0 %v292
        %475 = vmatprep.subr.mxu0 0.0
        %476 = vmatpush1.msra.mxu0 %v291
        %477 = vmatprep.subr.mxu0 0.0
        %478 = vmatpush2.msra.mxu0 0.0
        %479 = vmatprep.subr.mxu0 0.0
        %480 = vmatpush2.msra.mxu0 0.0
        %481 = vmatprep.subr.mxu0 0.0
        %482 = vmatpush2.msra.mxu0 0.0
        %483 = vmatprep.subr.mxu0 0.0
        %484 = vmatpush2.msra.mxu0 0.0
        %485 = vmatprep.subr.mxu0 0.0
        %486 = vmatpush2.msra.mxu0 0.0
        %487 = vmatprep.subr.mxu0 0.0
        %488 = vmatpush2.msra.mxu0 0.0
        %489 = vmatprep.subr.mxu0 0.0
        %490 = vmatpush2.msra.mxu0 0.0
        %491 = vmatprep.subr.mxu0 0.0
        %492 = vmatpush2.msra.mxu0 0.0
        %493 = vmatprep.subr.mxu0 0.0
        %494 = vmatpush2.msra.mxu0 0.0
        %495 = vmatprep.subr.mxu0 0.0
        %496 = vmatpush2.msra.mxu0 0.0
        %497 = vmatprep.subr.mxu0 0.0
        %498 = vmatpush2.msra.mxu0 0.0
        %499 = vmatprep.subr.mxu0 0.0
        %500 = vmatpush2.msra.mxu0 0.0
        %501 = vmatprep.subr.mxu0 0.0
        %502 = vmatpush2.msra.mxu0 0.0
        %503 = vmatprep.subr.mxu0 0.0
        %504 = vmatpush2.msra.mxu0 0.0
        %505 = vmatprep.subr.mxu0 0.0
        %506 = vmatpush2.msra.mxu0 0.0
        %507 = vmatprep.subr.mxu0 0.0
        %508 = vmatpush2.msra.mxu0 0.0
        %509 = vmatprep.mubr.f32.mxu0 0.0
        %510 = vmatmul.mubr.f32.gmra.mxu0 %v443
        %v511 = vpop.f32.mrf.mxu0
        %v512 = vadd.f32 0.0, %v511
        %v513 = vpop.f32.mrf.mxu0
        %514 = vdwg.mxu0
        %vm515 = vcmask 64512
        %516 = vst.msk [vmem:[%s275] sm:$0xff] %vm515, %v512
        %v518 = vsel %vm287, %v439, 0
        %520 = vmatprep.subr.mxu0 0.0
        %521 = vmatpush1.msra.mxu0 0.0
        %522 = vmatprep.subr.mxu0 0.0
        %523 = vmatpush1.msra.mxu0 0.0
        %524 = vmatprep.subr.mxu0 0.0
        %525 = vmatpush1.msra.mxu0 0.0
        %526 = vmatprep.subr.mxu0 0.0
        %527 = vmatpush1.msra.mxu0 0.0
        %528 = vmatprep.subr.mxu0 0.0
        %529 = vmatpush1.msra.mxu0 0.0
        %530 = vmatprep.subr.mxu0 0.0
        %531 = vmatpush1.msra.mxu0 0.0
        %532 = vmatprep.subr.mxu0 0.0
        %533 = vmatpush1.msra.mxu0 0.0
        %534 = vmatprep.subr.mxu0 0.0
        %535 = vmatpush1.msra.mxu0 0.0
        %536 = vmatprep.subr.mxu0 0.0
        %537 = vmatpush1.msra.mxu0 0.0
        %538 = vmatprep.subr.mxu0 0.0
        %539 = vmatpush1.msra.mxu0 0.0
        %540 = vmatprep.subr.mxu0 0.0
        %541 = vmatpush1.msra.mxu0 0.0
        %542 = vmatprep.subr.mxu0 0.0
        %543 = vmatpush1.msra.mxu0 0.0
        %544 = vmatprep.subr.mxu0 0.0
        %545 = vmatpush1.msra.mxu0 0.0
        %546 = vmatprep.subr.mxu0 0.0
        %547 = vmatpush1.msra.mxu0 0.0
        %548 = vmatprep.subr.mxu0 0.0
        %549 = vmatpush1.msra.mxu0 %v292
        %550 = vmatprep.subr.mxu0 0.0
        %551 = vmatpush1.msra.mxu0 %v291
        %552 = vmatprep.subr.mxu0 0.0
        %553 = vmatpush2.msra.mxu0 0.0
        %554 = vmatprep.subr.mxu0 0.0
        %555 = vmatpush2.msra.mxu0 0.0
        %556 = vmatprep.subr.mxu0 0.0
        %557 = vmatpush2.msra.mxu0 0.0
        %558 = vmatprep.subr.mxu0 0.0
        %559 = vmatpush2.msra.mxu0 0.0
        %560 = vmatprep.subr.mxu0 0.0
        %561 = vmatpush2.msra.mxu0 0.0
        %562 = vmatprep.subr.mxu0 0.0
        %563 = vmatpush2.msra.mxu0 0.0
        %564 = vmatprep.subr.mxu0 0.0
        %565 = vmatpush2.msra.mxu0 0.0
        %566 = vmatprep.subr.mxu0 0.0
        %567 = vmatpush2.msra.mxu0 0.0
        %568 = vmatprep.subr.mxu0 0.0
        %569 = vmatpush2.msra.mxu0 0.0
        %570 = vmatprep.subr.mxu0 0.0
        %571 = vmatpush2.msra.mxu0 0.0
        %572 = vmatprep.subr.mxu0 0.0
        %573 = vmatpush2.msra.mxu0 0.0
        %574 = vmatprep.subr.mxu0 0.0
        %575 = vmatpush2.msra.mxu0 0.0
        %576 = vmatprep.subr.mxu0 0.0
        %577 = vmatpush2.msra.mxu0 0.0
        %578 = vmatprep.subr.mxu0 0.0
        %579 = vmatpush2.msra.mxu0 0.0
        %580 = vmatprep.subr.mxu0 0.0
        %581 = vmatpush2.msra.mxu0 0.0
        %582 = vmatprep.subr.mxu0 0.0
        %583 = vmatpush2.msra.mxu0 0.0
        %584 = vmatprep.mubr.f32.mxu0 0.0
        %585 = vmatmul.mubr.f32.gmra.mxu0 %v518
        %v586 = vpop.f32.mrf.mxu0
        %v587 = vadd.f32 0.0, %v586
        %v588 = vpop.f32.mrf.mxu0
        %589 = vdwg.mxu0
        %590 = vst.msk [vmem:[%s282] sm:$0xff] %vm515, %v587
        %s591 = sand.u32 %s118, 1
        %s592 = scalar_lea.sflag [#allocation4], %s591
        %s593 = sand.u32 %s118, 1
        %s594 = smul.addr %s593, 16
        %s595 = scalar_lea.vmem [#allocation5], %s594
        %s596 = sand.u32 %s26, 1
        %s597 = scalar_lea.sflag [#allocation7], %s596
        %s598 = sand.u32 %s146, 1
        %s599 = smul.addr %s598, 8
        %s600 = scalar_lea.vmem [#allocation6], %s599
        %s601 = sand.u32 %s26, 1
        %s602 = scalar_lea.sflag [#allocation7], %s601
        %s603 = sand.u32 %s174, 1
        %s604 = smul.addr %s603, 8
        %s605 = scalar_lea.vmem [#allocation8], %s604
        // Predicated region
        $region37: #{tpu_custom_call.1} parent=31 // pred_check
          %p606 = pneg %p128
        $region38: #{tpu_custom_call.1} parent=31 // pred_check_branch
          %608 = sbr.rel (%p606) target = $region40
        $region39: #{tpu_custom_call.1} parent=31 // pred_region
          %s609 = smul.u32 2, %s31
          %s611 = ssub.s32 256, 256
          %612 = vsyncadd %s592, %s611
          %s613 = smul.addr %s30, 2
          %s614 = sadd.s32 %s609, %s613
          %s615 = smul.addr %s614, 128
          %s616 = scalar_lea.hbm %s3, %s615
          %s617 = sshll.u32 %s595, 4
          %s618 = int_to_ptr.vmem [resolvable:$true] %s617
          %623 = dma.vmem_to_hbm [thread:$0]  %s618, 256, %s616, %s592, 128, 128, 8
        $region40: #{tpu_custom_call.1} parent=31 // pred_fallthru
          _
        // Predicated region
        $region41: #{tpu_custom_call.1} parent=31 // pred_check
          %p624 = pneg %p156
        $region42: #{tpu_custom_call.1} parent=31 // pred_check_branch
          %626 = sbr.rel (%p624) target = $region44
        $region43: #{tpu_custom_call.1} parent=31 // pred_region
          %s628 = ssub.s32 128, 128
          %629 = vsyncadd %s597, %s628
          %s630 = sadd.s32 %s31, %s30
          %s631 = smul.addr %s630, 128
          %s632 = scalar_lea.hbm %s4, %s631
          %s634 = sshll.u32 %s600, 4
          %s635 = int_to_ptr.vmem [resolvable:$true] %s634
          %637 = dma.vmem_to_hbm [thread:$0]  %s635, 128, %s632, %s597
        $region44: #{tpu_custom_call.1} parent=31 // pred_fallthru
          _
        // Predicated region
        $region45: #{tpu_custom_call.1} parent=31 // pred_check
          %p638 = pneg %p184
        $region46: #{tpu_custom_call.1} parent=31 // pred_check_branch
          %640 = sbr.rel (%p638) target = $region48
        $region47: #{tpu_custom_call.1} parent=31 // pred_region
          %s642 = ssub.s32 128, 128
          %643 = vsyncadd %s602, %s642
          %s644 = sadd.s32 %s31, %s30
          %s645 = smul.addr %s644, 128
          %s646 = scalar_lea.hbm %s5, %s645
          %s648 = sshll.u32 %s605, 4
          %s649 = int_to_ptr.vmem [resolvable:$true] %s648
          %651 = dma.vmem_to_hbm [thread:$0]  %s649, 128, %s646, %s602
        $region48: #{tpu_custom_call.1} parent=31 // pred_fallthru
          _
      $region32: #{tpu_custom_call.1} parent=5 // pred_fallthru
        _
      %p652 = scmp.le.s32.totalorder 2, %s21
      // Predicated region
      $region49: #{tpu_custom_call.1} parent=5 // pred_check
        %p653 = pneg %p652
      $region50: #{tpu_custom_call.1} parent=5 // pred_check_branch
        %655 = sbr.rel (%p653) target = $region52
      $region51: #{tpu_custom_call.1} parent=5 // pred_region
        %s656 = ssub.s32 %s21, 2
        // Predicated region
        $region53: #{tpu_custom_call.1} parent=51 // pred_check
          %p657 = pneg %p134
        $region54: #{tpu_custom_call.1} parent=51 // pred_check_branch
          %659 = sbr.rel (%p657) target = $region56
        $region55: #{tpu_custom_call.1} parent=51 // pred_region
          %s660 = sand.u32 %s119, 1
          %s661 = scalar_lea.sflag [#allocation4], %s660
          %s662 = sand.u32 %s119, 1
          %s663 = smul.addr %s662, 16
          %s664 = scalar_lea.vmem [#allocation5], %s663
          %665 = dma.done %s661, 256
        $region56: #{tpu_custom_call.1} parent=51 // pred_fallthru
          _
        // Predicated region
        $region57: #{tpu_custom_call.1} parent=51 // pred_check
          %p666 = pneg %p162
        $region58: #{tpu_custom_call.1} parent=51 // pred_check_branch
          %668 = sbr.rel (%p666) target = $region60
        $region59: #{tpu_custom_call.1} parent=51 // pred_region
          %s669 = sand.u32 %s27, 1
          %s670 = scalar_lea.sflag [#allocation7], %s669
          %s671 = sand.u32 %s147, 1
          %s672 = smul.addr %s671, 8
          %s673 = scalar_lea.vmem [#allocation6], %s672
          %674 = dma.done %s670, 128
        $region60: #{tpu_custom_call.1} parent=51 // pred_fallthru
          _
        // Predicated region
        $region61: #{tpu_custom_call.1} parent=51 // pred_check
          %p675 = pneg %p190
        $region62: #{tpu_custom_call.1} parent=51 // pred_check_branch
          %677 = sbr.rel (%p675) target = $region64
        $region63: #{tpu_custom_call.1} parent=51 // pred_region
          %s678 = sand.u32 %s27, 1
          %s679 = scalar_lea.sflag [#allocation7], %s678
          %s680 = sand.u32 %s175, 1
          %s681 = smul.addr %s680, 8
          %s682 = scalar_lea.vmem [#allocation8], %s681
          %683 = dma.done %s679, 128
        $region64: #{tpu_custom_call.1} parent=51 // pred_fallthru
          _
      $region52: #{tpu_custom_call.1} parent=5 // pred_fallthru
        _
    $region6: #{tpu_custom_call.1} parent=1 // loop_footer
      %s25 = sadd.s32 1, %s21
    $region7: #{tpu_custom_call.1} parent=1 // loop_footer_branch
      %20 = sbr.rel target = $region3
    $region8: #{tpu_custom_call.1} parent=1 // loop_exit
      _
    %684 = vsyncpa [#allocation3], 1
    %s685 = scalar_lea.sflag [#allocation3], 1
    %686 = vsyncpa %s685, 1
    %687 = vsyncpa [#allocation4], 1
    %s688 = scalar_lea.sflag [#allocation4], 1
    %689 = vsyncpa %s688, 1
    %690 = vsyncpa [#allocation7], 1
    %s691 = scalar_lea.sflag [#allocation7], 1
    %692 = vsyncpa %s691, 1

</llo_original>
